<compile_context>
chip_gen: v7x
topology: tpu7x:2x2x1
jax: 0.10.0
libtpu: 0.0.40
codegen_flags: <defaults>
</compile_context>

<pallas_src>
import jax
import jax.numpy as jnp
from jax.experimental import pallas as pl
from jax.experimental.pallas import tpu as pltpu

HIDDEN = 64
LANE = 128


def mlp_kernel(params_ref, x_ref, o_ref):
    # params: (64, 4)  col 0 = w1, col 1 = b1, col 2 = w2, col 3 = b2 (bcast)
    # x:      (1, TILE)   batch on the lane axis
    # o:      (1, TILE)
    w1 = params_ref[:, 0:1]          # (64, 1)
    b1 = params_ref[:, 1:2]          # (64, 1)
    w2 = params_ref[:, 2:3]          # (64, 1)
    b2 = params_ref[0:1, 3:4]        # (1, 1)

    x = x_ref[...]                                   # (1, TILE)
    h = jnp.maximum(w1 * x + b1, 0.0)                # (64, TILE)  VPU only
    y = jnp.sum(h * w2, axis=0, keepdims=True) + b2  # (1, TILE)   VPU + XLU
    o_ref[...] = y.astype(o_ref.dtype)


def mlp_forward(x, w1, b1, w2, b2, *, tile=2048):
    """x: (B, 1). w1: (64, 1), b1: (64,), w2: (1, 64), b2: (1,) — torch Linear layout."""
    B = x.shape[0]

    # Pack all parameters into one small resident VMEM tile: (64, 4).
    params = jnp.stack(
        [
            w1.reshape(HIDDEN),
            b1.reshape(HIDDEN),
            w2.reshape(HIDDEN),
            jnp.broadcast_to(b2.reshape(1), (HIDDEN,)),
        ],
        axis=1,
    ).astype(jnp.float32)

    # Lane-dense batch row, padded up to a whole number of lane-aligned tiles.
    b_lane = max(LANE, ((B + LANE - 1) // LANE) * LANE)
    tile = min(tile, b_lane)                 # don't over-pad tiny batches
    num_tiles = pl.cdiv(b_lane, tile)
    b_padded = num_tiles * tile

    x_row = x.reshape(1, B).astype(jnp.float32)
    if b_padded != B:
        x_row = jnp.pad(x_row, ((0, 0), (0, b_padded - B)))

    out_row = pl.pallas_call(
        mlp_kernel,
        out_shape=jax.ShapeDtypeStruct((1, b_padded), jnp.float32),
        grid=(num_tiles,),
        in_specs=[
            # Weights/biases: constant index_map -> DMA'd once, stay resident.
            pl.BlockSpec((HIDDEN, 4), lambda i: (0, 0)),
            # Batch tile, lane-dense.
            pl.BlockSpec((1, tile), lambda i: (0, i)),
        ],
        out_specs=pl.BlockSpec((1, tile), lambda i: (0, i)),
        compiler_params=pltpu.CompilerParams(
            dimension_semantics=("parallel",),
        ),
    )(params, x_row)

    return out_row[0, :B].reshape(B, 1)


if __name__ == "__main__":
    key = jax.random.PRNGKey(0)
    k_x, k_w1, k_b1, k_w2, k_b2 = jax.random.split(key, 5)

    B = 8
    x = jax.random.normal(k_x, (B, 1), dtype=jnp.float32)

    # Deterministic synthetic parameters (torch nn.Linear shapes: (out, in)).
    w1 = jax.random.normal(k_w1, (HIDDEN, 1), dtype=jnp.float32) * 0.5
    b1 = jax.random.normal(k_b1, (HIDDEN,), dtype=jnp.float32) * 0.1
    w2 = jax.random.normal(k_w2, (1, HIDDEN), dtype=jnp.float32) * 0.5
    b2 = jax.random.normal(k_b2, (1,), dtype=jnp.float32) * 0.1

    out = mlp_forward(x, w1, b1, w2, b2)
    jax.block_until_ready(out)

    # Reference check in plain JAX (same math as the PyTorch module).
    ref = jnp.maximum(x @ w1.T + b1[None, :], 0.0) @ w2.T + b2[None, :]
    assert out.shape == (B, 1)
    assert jnp.allclose(out, ref, atol=1e-5, rtol=1e-5)

    print("KERNEL_OK")
</pallas_src>

<mosaic_0001>
module attributes {stable_mosaic.version = 11 : i64} {
  func.func @mlp_kernel(%arg0: i32, %arg1: memref<64x4xf32, #tpu.memory_space<vmem>>, %arg2: memref<1x128xf32, #tpu.memory_space<vmem>>, %arg3: memref<1x128xf32, #tpu.memory_space<vmem>>) attributes {dimension_semantics = [#tpu.dimension_semantics<parallel>], iteration_bounds = array<i64: 1>, scalar_prefetch = 0 : i64, scratch_operands = 0 : i64, tpu.core_type = #tpu.core_type<tc>, window_params = [{pipeline_mode = #tpu.pipeline_mode<synchronous>, transform_indices = @transform_0, window_bounds = array<i64: 64, 4>}, {transform_indices = @transform_1, window_bounds = array<i64: 1, 128>}, {transform_indices = @transform_2, window_bounds = array<i64: 1, 128>}]} {
    %c0 = arith.constant 0 : index
    %c0_0 = arith.constant 0 : index
    %0 = vector.load %arg1[%c0, %c0_0] : memref<64x4xf32, #tpu.memory_space<vmem>>, vector<64x1xf32>
    %c0_1 = arith.constant 0 : index
    %c1 = arith.constant 1 : index
    %1 = vector.load %arg1[%c0_1, %c1] : memref<64x4xf32, #tpu.memory_space<vmem>>, vector<64x1xf32>
    %c0_2 = arith.constant 0 : index
    %c2 = arith.constant 2 : index
    %2 = vector.load %arg1[%c0_2, %c2] : memref<64x4xf32, #tpu.memory_space<vmem>>, vector<64x1xf32>
    %c0_3 = arith.constant 0 : index
    %c3 = arith.constant 3 : index
    %3 = vector.load %arg1[%c0_3, %c3] : memref<64x4xf32, #tpu.memory_space<vmem>>, vector<1x1xf32>
    %c0_4 = arith.constant 0 : index
    %c0_5 = arith.constant 0 : index
    %4 = vector.load %arg2[%c0_4, %c0_5] : memref<1x128xf32, #tpu.memory_space<vmem>>, vector<1x128xf32>
    %5 = vector.broadcast %0 : vector<64x1xf32> to vector<64x128xf32>
    %6 = vector.broadcast %4 : vector<1x128xf32> to vector<64x128xf32>
    %7 = arith.mulf %5, %6 : vector<64x128xf32>
    %8 = vector.broadcast %1 : vector<64x1xf32> to vector<64x128xf32>
    %9 = arith.addf %7, %8 : vector<64x128xf32>
    %cst = arith.constant 0.000000e+00 : f32
    %10 = vector.broadcast %cst : f32 to vector<64x128xf32>
    %11 = arith.maximumf %9, %10 : vector<64x128xf32>
    %12 = vector.broadcast %2 : vector<64x1xf32> to vector<64x128xf32>
    %13 = arith.mulf %11, %12 : vector<64x128xf32>
    %cst_6 = arith.constant dense<0.000000e+00> : vector<128xf32>
    %14 = vector.multi_reduction <add>, %13, %cst_6 [0] : vector<64x128xf32> to vector<128xf32>
    %15 = vector.shape_cast %14 : vector<128xf32> to vector<1x128xf32>
    %16 = vector.broadcast %3 : vector<1x1xf32> to vector<1x128xf32>
    %17 = arith.addf %15, %16 : vector<1x128xf32>
    %c0_7 = arith.constant 0 : index
    %c0_8 = arith.constant 0 : index
    %18 = vector.load %arg3[%c0_7, %c0_8] : memref<1x128xf32, #tpu.memory_space<vmem>>, vector<1x128xf32>
    tpu.vector_store %arg3[%c0_7, %c0_8], %17 {strides = array<i32>} : memref<1x128xf32, #tpu.memory_space<vmem>>, vector<1x128xf32>,
    return
  }
  func.func @transform_0(%arg0: i32) -> (i32, i32) {
    %c0_i32 = arith.constant 0 : i32
    %c0_i32_0 = arith.constant 0 : i32
    %c0_i32_1 = arith.constant 0 : i32
    return %c0_i32, %c0_i32_0 : i32, i32
  }
  func.func @transform_1(%arg0: i32) -> (i32, i32) {
    %c0_i32 = arith.constant 0 : i32
    %c0_i32_0 = arith.constant 0 : i32
    return %c0_i32, %arg0 : i32, i32
  }
  func.func @transform_2(%arg0: i32) -> (i32, i32) {
    %c0_i32 = arith.constant 0 : i32
    %c0_i32_0 = arith.constant 0 : i32
    return %c0_i32, %arg0 : i32, i32
  }
}

</mosaic_0001>

<llo_original>
// kernel: tpu_custom_call.1
$region0: #{tpu_custom_call.1}
  #allocation0 [shape = 'u32[]', space=smem, size = 0x4, offset = 0x4, fixed_abs, tag = 'smem constant byte address 0x4 - core index']
  #allocation1 [shape = 'u32[144,128]{1,0:T(1,128)}', space=vmem, size = 0x12000, scoped, tag = 'internal scratch']
  %s0 = inlined_call_operand.vmem [shape: f32[64,4], index: 0, kind: input, shape index: {}]
  %s1 = inlined_call_operand.vmem [shape: f32[1,128], index: 1, kind: input, shape index: {}]
  %s2 = inlined_call_operand.hbm [shape: f32[1,128], index: 2, kind: output, shape index: {}]
  %s3 = sld [smem:[#allocation0]]
  $region18: #{tpu_custom_call.1} parent=0
    _
  %s5 = ssub.s32 1, %s3
  %s6 = scalar_select 0, %s5, %s3
  $region1: #{tpu_custom_call.1} parent=0
    #allocation2 [shape = 'u8[512]{0}', space=vmem, size = 0x400, scoped, tag = 'output window, operand 0, single buffered']
    #allocation3 [shape = 's32[1]{0}', space=sflag, size = 0x4, scoped, tag = 'scoped memory for tpu_custom_call.1']
    %7 = vsyncpa [#allocation3], 0
    // Predicated region
    $region2: #{tpu_custom_call.1} parent=1 // pred_check
      _
    $region3: #{tpu_custom_call.1} parent=1 // pred_check_branch
      %9 = sbr.rel (0) target = $region5
    $region4: #{tpu_custom_call.1} parent=1 // pred_region
      _
    $region5: #{tpu_custom_call.1} parent=1 // pred_fallthru
      _
    // Predicated region
    $region6: #{tpu_custom_call.1} parent=1 // pred_check
      _
    $region7: #{tpu_custom_call.1} parent=1 // pred_check_branch
      %11 = sbr.rel (0) target = $region9
    $region8: #{tpu_custom_call.1} parent=1 // pred_region
      _
    $region9: #{tpu_custom_call.1} parent=1 // pred_fallthru
      _
    %v12 = vld [vmem:[%s0] sm:$0xff]
    %v13 = vld [vmem:[%s0 + $0x8] sm:$0xff]
    %v14 = vld [vmem:[%s0 + $0x10] sm:$0xff]
    %v15 = vld [vmem:[%s0 + $0x18] sm:$0xff]
    %v16 = vld [vmem:[%s0 + $0x20] sm:$0xff]
    %v17 = vld [vmem:[%s0 + $0x28] sm:$0xff]
    %v18 = vld [vmem:[%s0 + $0x30] sm:$0xff]
    %v19 = vld [vmem:[%s0 + $0x38] sm:$0xff]
    %v20 = vld [vmem:[%s0] sm:$0x1]
    %v21 = vld [vmem:[%s1] sm:$0x1]
    %23 = vset.pattern.permute.xlu0 0
    %24 = vperm.xlu0 %23, %v12
    %v25 = vpop.permute.xlu0 %24
    %28 = vset.pattern.permute.xlu0 0
    %29 = vperm.xlu0 %28, %v13
    %v30 = vpop.permute.xlu0 %29
    %33 = vset.pattern.permute.xlu0 0
    %34 = vperm.xlu0 %33, %v14
    %v35 = vpop.permute.xlu0 %34
    %38 = vset.pattern.permute.xlu0 0
    %39 = vperm.xlu0 %38, %v15
    %v40 = vpop.permute.xlu0 %39
    %43 = vset.pattern.permute.xlu0 0
    %44 = vperm.xlu0 %43, %v16
    %v45 = vpop.permute.xlu0 %44
    %48 = vset.pattern.permute.xlu0 0
    %49 = vperm.xlu0 %48, %v17
    %v50 = vpop.permute.xlu0 %49
    %53 = vset.pattern.permute.xlu0 0
    %54 = vperm.xlu0 %53, %v18
    %v55 = vpop.permute.xlu0 %54
    %58 = vset.pattern.permute.xlu0 0
    %59 = vperm.xlu0 %58, %v19
    %v60 = vpop.permute.xlu0 %59
    %v63 = vlaneseq
    %v64 = vshrl.u32 %v63, 7
    %v65 = vsub.s32 0, %v64
    %v66 = vrot.slane %v21, %v65
    %v68 = vmul.f32 %v25, %v66
    %v69 = vmul.f32 %v30, %v66
    %v70 = vmul.f32 %v35, %v66
    %v71 = vmul.f32 %v40, %v66
    %v72 = vmul.f32 %v45, %v66
    %v73 = vmul.f32 %v50, %v66
    %v74 = vmul.f32 %v55, %v66
    %v75 = vmul.f32 %v60, %v66
    %76 = vset.pattern.permute.xlu0 1
    %77 = vperm.xlu0 %76, %v12
    %v78 = vpop.permute.xlu0 %77
    %80 = vset.pattern.permute.xlu0 1
    %81 = vperm.xlu0 %80, %v13
    %v82 = vpop.permute.xlu0 %81
    %84 = vset.pattern.permute.xlu0 1
    %85 = vperm.xlu0 %84, %v14
    %v86 = vpop.permute.xlu0 %85
    %88 = vset.pattern.permute.xlu0 1
    %89 = vperm.xlu0 %88, %v15
    %v90 = vpop.permute.xlu0 %89
    %92 = vset.pattern.permute.xlu0 1
    %93 = vperm.xlu0 %92, %v16
    %v94 = vpop.permute.xlu0 %93
    %96 = vset.pattern.permute.xlu0 1
    %97 = vperm.xlu0 %96, %v17
    %v98 = vpop.permute.xlu0 %97
    %100 = vset.pattern.permute.xlu0 1
    %101 = vperm.xlu0 %100, %v18
    %v102 = vpop.permute.xlu0 %101
    %104 = vset.pattern.permute.xlu0 1
    %105 = vperm.xlu0 %104, %v19
    %v106 = vpop.permute.xlu0 %105
    %v108 = vadd.f32 %v68, %v78
    %v109 = vadd.f32 %v69, %v82
    %v110 = vadd.f32 %v70, %v86
    %v111 = vadd.f32 %v71, %v90
    %v112 = vadd.f32 %v72, %v94
    %v113 = vadd.f32 %v73, %v98
    %v114 = vadd.f32 %v74, %v102
    %v115 = vadd.f32 %v75, %v106
    %v116 = vmax.f32 %v108, 0.0
    %v117 = vmax.f32 %v109, 0.0
    %v118 = vmax.f32 %v110, 0.0
    %v119 = vmax.f32 %v111, 0.0
    %v120 = vmax.f32 %v112, 0.0
    %v121 = vmax.f32 %v113, 0.0
    %v122 = vmax.f32 %v114, 0.0
    %v123 = vmax.f32 %v115, 0.0
    %124 = vset.pattern.permute.xlu0 2
    %125 = vperm.xlu0 %124, %v12
    %v126 = vpop.permute.xlu0 %125
    %128 = vset.pattern.permute.xlu0 2
    %129 = vperm.xlu0 %128, %v13
    %v130 = vpop.permute.xlu0 %129
    %132 = vset.pattern.permute.xlu0 2
    %133 = vperm.xlu0 %132, %v14
    %v134 = vpop.permute.xlu0 %133
    %136 = vset.pattern.permute.xlu0 2
    %137 = vperm.xlu0 %136, %v15
    %v138 = vpop.permute.xlu0 %137
    %140 = vset.pattern.permute.xlu0 2
    %141 = vperm.xlu0 %140, %v16
    %v142 = vpop.permute.xlu0 %141
    %144 = vset.pattern.permute.xlu0 2
    %145 = vperm.xlu0 %144, %v17
    %v146 = vpop.permute.xlu0 %145
    %148 = vset.pattern.permute.xlu0 2
    %149 = vperm.xlu0 %148, %v18
    %v150 = vpop.permute.xlu0 %149
    %152 = vset.pattern.permute.xlu0 2
    %153 = vperm.xlu0 %152, %v19
    %v154 = vpop.permute.xlu0 %153
    %v156 = vmul.f32 %v116, %v126
    %v157 = vmul.f32 %v117, %v130
    %v158 = vmul.f32 %v118, %v134
    %v159 = vmul.f32 %v119, %v138
    %v160 = vmul.f32 %v120, %v142
    %v161 = vmul.f32 %v121, %v146
    %v162 = vmul.f32 %v122, %v150
    %v163 = vmul.f32 %v123, %v154
    %v164 = vadd.f32 %v156, %v157
    %v165 = vadd.f32 %v164, %v158
    %v166 = vadd.f32 %v165, %v159
    %v167 = vadd.f32 %v166, %v160
    %v168 = vadd.f32 %v167, %v161
    %v169 = vadd.f32 %v168, %v162
    %v170 = vadd.f32 %v169, %v163
    %v171 = vrot.slane %v170, 4
    %v172 = vadd.f32 %v170, %v171
    %v173 = vrot.slane %v172, 2
    %v174 = vadd.f32 %v172, %v173
    %v175 = vrot.slane %v174, 1
    %v176 = vadd.f32 %v174, %v175
    %178 = vset.pattern.permute.xlu0 3
    %179 = vperm.xlu0 %178, %v20
    %v180 = vpop.permute.xlu0 %179
    %v182 = vadd.f32 %v176, %v180
    %183 = vst [vmem:[#allocation2] sm:$0x1] %v182
    // Predicated region
    $region10: #{tpu_custom_call.1} parent=1 // pred_check
      _
    $region11: #{tpu_custom_call.1} parent=1 // pred_check_branch
      %185 = sbr.rel (0) target = $region13
    $region12: #{tpu_custom_call.1} parent=1 // pred_region
      %s187 = ssub.s32 16, 16
      %188 = vsyncadd [#allocation3], %s187
      %s190 = sshll.u32 [#allocation2], 4
      %s191 = int_to_ptr.vmem [resolvable:$true] %s190
      %193 = dma.vmem_to_hbm [thread:$0]  %s191, 16, %s2, [#allocation3]
    $region13: #{tpu_custom_call.1} parent=1 // pred_fallthru
      _
    // Predicated region
    $region14: #{tpu_custom_call.1} parent=1 // pred_check
      _
    $region15: #{tpu_custom_call.1} parent=1 // pred_check_branch
      %195 = sbr.rel (0) target = $region17
    $region16: #{tpu_custom_call.1} parent=1 // pred_region
      %196 = dma.done [#allocation3], 16
    $region17: #{tpu_custom_call.1} parent=1 // pred_fallthru
      _
    %197 = vsyncpa [#allocation3], 1

</llo_original>
